<compile_context>
chip_gen: v6e
topology: v6e:2x2x1
jax: 0.10.0
libtpu: 0.0.40
codegen_flags: <defaults>
</compile_context>

<pallas_src>
import math

import jax
import jax.numpy as jnp
from jax.experimental import pallas as pl
from jax.experimental.pallas import tpu as pltpu


def _round_up(x, m):
    return ((x + m - 1) // m) * m


def _weightnet_kernel(*refs):
    # refs = (sa, w0, b0, w1, b1, ..., w_last, b_last, out)
    sa_ref, out_ref = refs[0], refs[-1]
    param_refs = refs[1:-1]
    h = sa_ref[...]                                           # (bt, in)
    n_layers = len(param_refs) // 2                           # hidden layers + last_fc
    for l in range(n_layers):                                 # static unroll
        w = param_refs[2 * l][...]
        b = param_refs[2 * l + 1][...]
        # Original module applies self.activ (relu) after every fc, including last_fc.
        h = jnp.maximum(
            jnp.dot(h, w, preferred_element_type=jnp.float32) + b, 0.0)
    out_ref[...] = h.astype(out_ref.dtype)


def weightnet_forward(state, action, params, *, block_b=128):
    """Equivalent of weightNet.forward(state, action)."""
    if state.ndim == 1:
        state = state[None, :]
    if action.ndim == 1:
        action = action[None, :]
    state = state.astype(jnp.float32)
    action = action.astype(jnp.float32)

    layers = list(params["fcs"]) + [params["last"]]           # [(w, b), ...]
    in_dim = layers[0][0].shape[0]
    out_dim = layers[-1][0].shape[1]
    B = state.shape[0]
    assert state.shape[1] + action.shape[1] == in_dim

    # torch.cat([state, action], -1) — done once in the wrapper.
    sa = jnp.concatenate([state, action], axis=-1)

    # Batch tiling: sublane-aligned tile; "parallel" grid axis for v7x megacore.
    bt = min(block_b, _round_up(B, 8))
    b_pad = _round_up(B, bt)
    if b_pad != B:
        sa = jnp.pad(sa, ((0, b_pad - B), (0, 0)))

    # Lane-dense output: pad last layer to a multiple of 128 output lanes
    # (zero pad is harmless: relu(0 @ w + 0) = 0); slice back after the call.
    out_pad = _round_up(out_dim, 128)
    wl, bl = layers[-1]
    if out_pad != out_dim:
        wl = jnp.pad(wl, ((0, 0), (0, out_pad - out_dim)))
        bl = jnp.pad(bl, ((0, 0), (0, out_pad - out_dim)))
        layers[-1] = (wl, bl)

    # Build specs / flat arg list.
    in_specs = [pl.BlockSpec((bt, in_dim), lambda i: (i, 0))]
    flat_args = [sa]
    for (w, b) in layers:
        di, do = w.shape
        in_specs.append(pl.BlockSpec((di, do), lambda i: (0, 0)))   # resident weight
        in_specs.append(pl.BlockSpec((1, do), lambda i: (0, 0)))    # resident bias
        flat_args.extend([w, b])

    grid = (b_pad // bt,)

    out = pl.pallas_call(
        _weightnet_kernel,
        out_shape=jax.ShapeDtypeStruct((b_pad, out_pad), jnp.float32),
        grid_spec=pltpu.PrefetchScalarGridSpec(
            num_scalar_prefetch=0,
            grid=grid,
            in_specs=in_specs,
            out_specs=pl.BlockSpec((bt, out_pad), lambda i: (i, 0)),
        ),
        compiler_params=pltpu.CompilerParams(
            dimension_semantics=("parallel",)),
    )(*flat_args)

    return out[:B, :out_dim]


def init_params(key, in_dim, out_dim, hidden_sizes=(32, 32)):
    """Deterministic synthetic init mirroring weightNet.reset_parameters."""
    init_w1 = 0.003
    b_init_value = 0.1
    keys = jax.random.split(key, len(hidden_sizes) + 2)

    fcs = []
    prev = in_dim
    for i, h in enumerate(hidden_sizes):
        bound = 1.0 / math.sqrt(prev)                         # fanin_init
        w = jax.random.uniform(keys[i], (prev, h), jnp.float32, -bound, bound)
        b = jnp.full((1, h), b_init_value, jnp.float32)
        fcs.append((w, b))
        prev = h
    wl = jax.random.uniform(keys[-2], (prev, out_dim), jnp.float32, -init_w1, init_w1)
    bl = jax.random.uniform(keys[-1], (1, out_dim), jnp.float32, -init_w1, init_w1)
    return {"fcs": tuple(fcs), "last": (wl, bl)}


def reference_forward(state, action, params):
    """Pure-JAX reference of weightNet.forward for verification."""
    if state.ndim == 1:
        state = state[None, :]
    if action.ndim == 1:
        action = action[None, :]
    sa = jnp.concatenate([state, action], axis=-1)
    h = sa
    for (w, b) in params["fcs"]:
        h = jnp.maximum(h @ w + b, 0.0)
    wl, bl = params["last"]
    return jnp.maximum(h @ wl + bl, 0.0)


if __name__ == "__main__":
    batch = 2
    state_dim = 8
    action_dim = 4
    hidden_sizes = (32, 32)
    output_dim = 4

    key = jax.random.PRNGKey(0)
    pkey, skey, akey = jax.random.split(key, 3)
    params = init_params(pkey, state_dim + action_dim, output_dim, hidden_sizes)
    state = jax.random.normal(skey, (batch, state_dim), jnp.float32)
    action = jax.random.normal(akey, (batch, action_dim), jnp.float32)

    out = weightnet_forward(state, action, params)
    jax.block_until_ready(out)

    ref = reference_forward(state, action, params)
    assert out.shape == (batch, output_dim)
    assert jnp.allclose(out, ref, atol=1e-5, rtol=1e-5), (out, ref)

    print("KERNEL_OK")
</pallas_src>

<mosaic_0001>
module attributes {stable_mosaic.version = 11 : i64} {
  func.func @_weightnet_kernel(%arg0: i32, %arg1: memref<8x12xf32, #tpu.memory_space<vmem>>, %arg2: memref<12x32xf32, #tpu.memory_space<vmem>>, %arg3: memref<1x32xf32, #tpu.memory_space<vmem>>, %arg4: memref<32x32xf32, #tpu.memory_space<vmem>>, %arg5: memref<1x32xf32, #tpu.memory_space<vmem>>, %arg6: memref<32x128xf32, #tpu.memory_space<vmem>>, %arg7: memref<1x128xf32, #tpu.memory_space<vmem>>, %arg8: memref<8x128xf32, #tpu.memory_space<vmem>>) attributes {dimension_semantics = [#tpu.dimension_semantics<parallel>], iteration_bounds = array<i64: 1>, scalar_prefetch = 0 : i64, scratch_operands = 0 : i64, tpu.core_type = #tpu.core_type<tc>, window_params = [{transform_indices = @transform_0, window_bounds = array<i64: 8, 12>}, {pipeline_mode = #tpu.pipeline_mode<synchronous>, transform_indices = @transform_1, window_bounds = array<i64: 12, 32>}, {pipeline_mode = #tpu.pipeline_mode<synchronous>, transform_indices = @transform_2, window_bounds = array<i64: 1, 32>}, {pipeline_mode = #tpu.pipeline_mode<synchronous>, transform_indices = @transform_3, window_bounds = array<i64: 32, 32>}, {pipeline_mode = #tpu.pipeline_mode<synchronous>, transform_indices = @transform_4, window_bounds = array<i64: 1, 32>}, {pipeline_mode = #tpu.pipeline_mode<synchronous>, transform_indices = @transform_5, window_bounds = array<i64: 32, 128>}, {pipeline_mode = #tpu.pipeline_mode<synchronous>, transform_indices = @transform_6, window_bounds = array<i64: 1, 128>}, {transform_indices = @transform_7, window_bounds = array<i64: 8, 128>}]} {
    %c0 = arith.constant 0 : index
    %c0_0 = arith.constant 0 : index
    %0 = vector.load %arg1[%c0, %c0_0] : memref<8x12xf32, #tpu.memory_space<vmem>>, vector<8x12xf32>
    %c0_1 = arith.constant 0 : index
    %c0_2 = arith.constant 0 : index
    %1 = vector.load %arg2[%c0_1, %c0_2] : memref<12x32xf32, #tpu.memory_space<vmem>>, vector<12x32xf32>
    %c0_3 = arith.constant 0 : index
    %c0_4 = arith.constant 0 : index
    %2 = vector.load %arg3[%c0_3, %c0_4] : memref<1x32xf32, #tpu.memory_space<vmem>>, vector<1x32xf32>
    %cst = arith.constant dense<0.000000e+00> : vector<8x32xf32>
    %3 = tpu.matmul %0, %1, %cst {dimension_numbers = #tpu.dot_dimension_numbers<[1], [0], [0], [1], [0, 0, 1, 1], [], []>} : vector<8x12xf32>, vector<12x32xf32>, vector<8x32xf32> -> vector<8x32xf32>
    %4 = vector.broadcast %2 : vector<1x32xf32> to vector<8x32xf32>
    %5 = arith.addf %3, %4 : vector<8x32xf32>
    %cst_5 = arith.constant 0.000000e+00 : f32
    %6 = vector.broadcast %cst_5 : f32 to vector<8x32xf32>
    %7 = arith.maximumf %5, %6 : vector<8x32xf32>
    %c0_6 = arith.constant 0 : index
    %c0_7 = arith.constant 0 : index
    %8 = vector.load %arg4[%c0_6, %c0_7] : memref<32x32xf32, #tpu.memory_space<vmem>>, vector<32x32xf32>
    %c0_8 = arith.constant 0 : index
    %c0_9 = arith.constant 0 : index
    %9 = vector.load %arg5[%c0_8, %c0_9] : memref<1x32xf32, #tpu.memory_space<vmem>>, vector<1x32xf32>
    %cst_10 = arith.constant dense<0.000000e+00> : vector<8x32xf32>
    %10 = tpu.matmul %7, %8, %cst_10 {dimension_numbers = #tpu.dot_dimension_numbers<[1], [0], [0], [1], [0, 0, 1, 1], [], []>} : vector<8x32xf32>, vector<32x32xf32>, vector<8x32xf32> -> vector<8x32xf32>
    %11 = vector.broadcast %9 : vector<1x32xf32> to vector<8x32xf32>
    %12 = arith.addf %10, %11 : vector<8x32xf32>
    %cst_11 = arith.constant 0.000000e+00 : f32
    %13 = vector.broadcast %cst_11 : f32 to vector<8x32xf32>
    %14 = arith.maximumf %12, %13 : vector<8x32xf32>
    %c0_12 = arith.constant 0 : index
    %c0_13 = arith.constant 0 : index
    %15 = vector.load %arg6[%c0_12, %c0_13] : memref<32x128xf32, #tpu.memory_space<vmem>>, vector<32x128xf32>
    %c0_14 = arith.constant 0 : index
    %c0_15 = arith.constant 0 : index
    %16 = vector.load %arg7[%c0_14, %c0_15] : memref<1x128xf32, #tpu.memory_space<vmem>>, vector<1x128xf32>
    %cst_16 = arith.constant dense<0.000000e+00> : vector<8x128xf32>
    %17 = tpu.matmul %14, %15, %cst_16 {dimension_numbers = #tpu.dot_dimension_numbers<[1], [0], [0], [1], [0, 0, 1, 1], [], []>} : vector<8x32xf32>, vector<32x128xf32>, vector<8x128xf32> -> vector<8x128xf32>
    %18 = vector.broadcast %16 : vector<1x128xf32> to vector<8x128xf32>
    %19 = arith.addf %17, %18 : vector<8x128xf32>
    %cst_17 = arith.constant 0.000000e+00 : f32
    %20 = vector.broadcast %cst_17 : f32 to vector<8x128xf32>
    %21 = arith.maximumf %19, %20 : vector<8x128xf32>
    %c0_18 = arith.constant 0 : index
    %c0_19 = arith.constant 0 : index
    %22 = vector.load %arg8[%c0_18, %c0_19] : memref<8x128xf32, #tpu.memory_space<vmem>>, vector<8x128xf32>
    tpu.vector_store %arg8[%c0_18, %c0_19], %21 {strides = array<i32>} : memref<8x128xf32, #tpu.memory_space<vmem>>, vector<8x128xf32>,
    return
  }
  func.func @transform_0(%arg0: i32) -> (i32, i32) {
    %c0_i32 = arith.constant 0 : i32
    %c0_i32_0 = arith.constant 0 : i32
    return %arg0, %c0_i32 : i32, i32
  }
  func.func @transform_1(%arg0: i32) -> (i32, i32) {
    %c0_i32 = arith.constant 0 : i32
    %c0_i32_0 = arith.constant 0 : i32
    %c0_i32_1 = arith.constant 0 : i32
    return %c0_i32, %c0_i32_0 : i32, i32
  }
  func.func @transform_2(%arg0: i32) -> (i32, i32) {
    %c0_i32 = arith.constant 0 : i32
    %c0_i32_0 = arith.constant 0 : i32
    %c0_i32_1 = arith.constant 0 : i32
    return %c0_i32, %c0_i32_0 : i32, i32
  }
  func.func @transform_3(%arg0: i32) -> (i32, i32) {
    %c0_i32 = arith.constant 0 : i32
    %c0_i32_0 = arith.constant 0 : i32
    %c0_i32_1 = arith.constant 0 : i32
    return %c0_i32, %c0_i32_0 : i32, i32
  }
  func.func @transform_4(%arg0: i32) -> (i32, i32) {
    %c0_i32 = arith.constant 0 : i32
    %c0_i32_0 = arith.constant 0 : i32
    %c0_i32_1 = arith.constant 0 : i32
    return %c0_i32, %c0_i32_0 : i32, i32
  }
  func.func @transform_5(%arg0: i32) -> (i32, i32) {
    %c0_i32 = arith.constant 0 : i32
    %c0_i32_0 = arith.constant 0 : i32
    %c0_i32_1 = arith.constant 0 : i32
    return %c0_i32, %c0_i32_0 : i32, i32
  }
  func.func @transform_6(%arg0: i32) -> (i32, i32) {
    %c0_i32 = arith.constant 0 : i32
    %c0_i32_0 = arith.constant 0 : i32
    %c0_i32_1 = arith.constant 0 : i32
    return %c0_i32, %c0_i32_0 : i32, i32
  }
  func.func @transform_7(%arg0: i32) -> (i32, i32) {
    %c0_i32 = arith.constant 0 : i32
    %c0_i32_0 = arith.constant 0 : i32
    return %arg0, %c0_i32 : i32, i32
  }
}

</mosaic_0001>

<llo_original>
// kernel: tpu_custom_call.1
$region0: #{tpu_custom_call.1}
  #allocation0 [shape = 'u32[]', space=smem, size = 0x4, offset = 0x4, fixed_abs, tag = 'smem constant byte address 0x4 - core index']
  #allocation1 [shape = 'u32[144,128]{1,0:T(1,128)}', space=vmem, size = 0x12000, scoped, tag = 'internal scratch']
  %s0 = inlined_call_operand.hbm [shape: f32[8,12], index: 0, kind: input, shape index: {}]
  %s1 = inlined_call_operand.hbm [shape: f32[12,32], index: 1, kind: input, shape index: {}]
  %s2 = inlined_call_operand.vmem [shape: f32[1,32], index: 2, kind: input, shape index: {}]
  %s3 = inlined_call_operand.hbm [shape: f32[32,32], index: 3, kind: input, shape index: {}]
  %s4 = inlined_call_operand.vmem [shape: f32[1,32], index: 4, kind: input, shape index: {}]
  %s5 = inlined_call_operand.hbm [shape: f32[32,128], index: 5, kind: input, shape index: {}]
  %s6 = inlined_call_operand.vmem [shape: f32[1,128], index: 6, kind: input, shape index: {}]
  %s7 = inlined_call_operand.hbm [shape: f32[8,128], index: 7, kind: output, shape index: {}]
  %s8 = sld [smem:[#allocation0]]
  $region54: #{tpu_custom_call.1} parent=0
    _
  %s10 = ssub.s32 1, %s8
  %s11 = scalar_select 0, %s10, %s8
  $region1: #{tpu_custom_call.1} parent=0
    #allocation2 [shape = 'u8[4096]{0}', space=vmem, size = 0x1000, scoped, tag = 'input window, operand 0, single buffered']
    #allocation3 [shape = 's32[1]{0}', space=sflag, size = 0x4, scoped, tag = 'scoped memory for tpu_custom_call.1']
    #allocation4 [shape = 's32[1]{0}', space=sflag, size = 0x4, scoped, tag = 'scoped memory for tpu_custom_call.1']
    #allocation5 [shape = 'u8[8192]{0}', space=vmem, size = 0x2000, scoped, tag = 'input window, operand 1, single buffered']
    #allocation6 [shape = 's32[1]{0}', space=sflag, size = 0x4, scoped, tag = 'scoped memory for tpu_custom_call.1']
    #allocation7 [shape = 'u8[16384]{0}', space=vmem, size = 0x4000, scoped, tag = 'input window, operand 3, single buffered']
    #allocation8 [shape = 'u8[16384]{0}', space=vmem, size = 0x4000, scoped, tag = 'input window, operand 5, single buffered']
    #allocation9 [shape = 's32[1]{0}', space=sflag, size = 0x4, scoped, tag = 'scoped memory for tpu_custom_call.1']
    #allocation10 [shape = 'u8[4096]{0}', space=vmem, size = 0x1000, scoped, tag = 'output window, operand 0, single buffered']
    %12 = vsyncpa [#allocation3], 0
    %13 = vsyncpa [#allocation6], 0
    %14 = vsyncpa [#allocation9], 0
    %15 = vsyncpa [#allocation4], 0
    // Predicated region
    $region2: #{tpu_custom_call.1} parent=1 // pred_check
      _
    $region3: #{tpu_custom_call.1} parent=1 // pred_check_branch
      %17 = sbr.rel (0) target = $region5
    $region4: #{tpu_custom_call.1} parent=1 // pred_region
      %s19 = ssub.s32 128, 128
      %20 = vsyncadd [#allocation3], %s19
      %s22 = sshll.u32 [#allocation2], 4
      %s23 = int_to_ptr.vmem [resolvable:$true] %s22
      %25 = dma.hbm_to_vmem [thread:$0]  %s0, 128, %s23, [#allocation3]
    $region5: #{tpu_custom_call.1} parent=1 // pred_fallthru
      _
    // Predicated region
    $region6: #{tpu_custom_call.1} parent=1 // pred_check
      _
    $region7: #{tpu_custom_call.1} parent=1 // pred_check_branch
      %27 = sbr.rel (0) target = $region9
    $region8: #{tpu_custom_call.1} parent=1 // pred_region
      %s29 = ssub.s32 256, 256
      %30 = vsyncadd [#allocation6], %s29
      %s31 = sshll.u32 [#allocation5], 4
      %s32 = int_to_ptr.vmem [resolvable:$true] %s31
      %37 = dma.hbm_to_vmem [thread:$0]  %s1, 256, %s32, [#allocation6], 128, 128, 8
    $region9: #{tpu_custom_call.1} parent=1 // pred_fallthru
      _
    // Predicated region
    $region10: #{tpu_custom_call.1} parent=1 // pred_check
      _
    $region11: #{tpu_custom_call.1} parent=1 // pred_check_branch
      %39 = sbr.rel (0) target = $region13
    $region12: #{tpu_custom_call.1} parent=1 // pred_region
      _
    $region13: #{tpu_custom_call.1} parent=1 // pred_fallthru
      _
    // Predicated region
    $region14: #{tpu_custom_call.1} parent=1 // pred_check
      _
    $region15: #{tpu_custom_call.1} parent=1 // pred_check_branch
      %41 = sbr.rel (0) target = $region17
    $region16: #{tpu_custom_call.1} parent=1 // pred_region
      %s43 = ssub.s32 512, 512
      %44 = vsyncadd [#allocation6], %s43
      %s45 = sshll.u32 [#allocation7], 4
      %s46 = int_to_ptr.vmem [resolvable:$true] %s45
      %51 = dma.hbm_to_vmem [thread:$0]  %s3, 512, %s46, [#allocation6], 128, 128, 8
    $region17: #{tpu_custom_call.1} parent=1 // pred_fallthru
      _
    // Predicated region
    $region18: #{tpu_custom_call.1} parent=1 // pred_check
      _
    $region19: #{tpu_custom_call.1} parent=1 // pred_check_branch
      %53 = sbr.rel (0) target = $region21
    $region20: #{tpu_custom_call.1} parent=1 // pred_region
      _
    $region21: #{tpu_custom_call.1} parent=1 // pred_fallthru
      _
    // Predicated region
    $region22: #{tpu_custom_call.1} parent=1 // pred_check
      _
    $region23: #{tpu_custom_call.1} parent=1 // pred_check_branch
      %55 = sbr.rel (0) target = $region25
    $region24: #{tpu_custom_call.1} parent=1 // pred_region
      %s57 = ssub.s32 512, 512
      %58 = vsyncadd [#allocation9], %s57
      %s59 = sshll.u32 [#allocation8], 4
      %s60 = int_to_ptr.vmem [resolvable:$true] %s59
      %65 = dma.hbm_to_vmem [thread:$0]  %s5, 512, %s60, [#allocation9], 128, 128, 8
    $region25: #{tpu_custom_call.1} parent=1 // pred_fallthru
      _
    // Predicated region
    $region26: #{tpu_custom_call.1} parent=1 // pred_check
      _
    $region27: #{tpu_custom_call.1} parent=1 // pred_check_branch
      %67 = sbr.rel (0) target = $region29
    $region28: #{tpu_custom_call.1} parent=1 // pred_region
      _
    $region29: #{tpu_custom_call.1} parent=1 // pred_fallthru
      _
    // Predicated region
    $region30: #{tpu_custom_call.1} parent=1 // pred_check
      _
    $region31: #{tpu_custom_call.1} parent=1 // pred_check_branch
      %69 = sbr.rel (0) target = $region33
    $region32: #{tpu_custom_call.1} parent=1 // pred_region
      %70 = dma.done [#allocation3], 128
    $region33: #{tpu_custom_call.1} parent=1 // pred_fallthru
      _
    // Predicated region
    $region34: #{tpu_custom_call.1} parent=1 // pred_check
      _
    $region35: #{tpu_custom_call.1} parent=1 // pred_check_branch
      %72 = sbr.rel (0) target = $region37
    $region36: #{tpu_custom_call.1} parent=1 // pred_region
      %73 = dma.done [#allocation6], 256
    $region37: #{tpu_custom_call.1} parent=1 // pred_fallthru
      _
    // Predicated region
    $region38: #{tpu_custom_call.1} parent=1 // pred_check
      _
    $region39: #{tpu_custom_call.1} parent=1 // pred_check_branch
      %75 = sbr.rel (0) target = $region41
    $region40: #{tpu_custom_call.1} parent=1 // pred_region
      %76 = dma.done [#allocation6], 512
    $region41: #{tpu_custom_call.1} parent=1 // pred_fallthru
      _
    // Predicated region
    $region42: #{tpu_custom_call.1} parent=1 // pred_check
      _
    $region43: #{tpu_custom_call.1} parent=1 // pred_check_branch
      %78 = sbr.rel (0) target = $region45
    $region44: #{tpu_custom_call.1} parent=1 // pred_region
      %79 = dma.done [#allocation9], 512
    $region45: #{tpu_custom_call.1} parent=1 // pred_fallthru
      _
    %v80 = vld [vmem:[#allocation2] sm:$0xff]
    %v81 = vld [vmem:[#allocation5] sm:$0xff]
    %v82 = vld [vmem:[#allocation5 + $0x8] sm:$0xf]
    %v83 = vld [vmem:[%s2] sm:$0x1]
    %v85 = vlaneseq
    %v86 = vshrl.u32 %v85, 7
    %v87 = vsub.s32 0, %v86
    %v88 = vrot.slane %v83, %v87
    %vm90 = vcmask 97280
    %v92 = vsel %vm90, %v80, 0
    %vm94 = vcmask 1043456
    %v96 = vsel %vm94, %v82, 0
    %98 = vmatprep.subr.mxu0 0.0
    %99 = vmatpush1.msra.mxu0 0.0
    %100 = vmatprep.subr.mxu0 0.0
    %101 = vmatpush1.msra.mxu0 0.0
    %102 = vmatprep.subr.mxu0 0.0
    %103 = vmatpush1.msra.mxu0 0.0
    %104 = vmatprep.subr.mxu0 0.0
    %105 = vmatpush1.msra.mxu0 0.0
    %106 = vmatprep.subr.mxu0 0.0
    %107 = vmatpush1.msra.mxu0 0.0
    %108 = vmatprep.subr.mxu0 0.0
    %109 = vmatpush1.msra.mxu0 0.0
    %110 = vmatprep.subr.mxu0 0.0
    %111 = vmatpush1.msra.mxu0 0.0
    %112 = vmatprep.subr.mxu0 0.0
    %113 = vmatpush1.msra.mxu0 0.0
    %114 = vmatprep.subr.mxu0 0.0
    %115 = vmatpush1.msra.mxu0 0.0
    %116 = vmatprep.subr.mxu0 0.0
    %117 = vmatpush1.msra.mxu0 0.0
    %118 = vmatprep.subr.mxu0 0.0
    %119 = vmatpush1.msra.mxu0 0.0
    %120 = vmatprep.subr.mxu0 0.0
    %121 = vmatpush1.msra.mxu0 0.0
    %122 = vmatprep.subr.mxu0 0.0
    %123 = vmatpush1.msra.mxu0 0.0
    %124 = vmatprep.subr.mxu0 0.0
    %125 = vmatpush1.msra.mxu0 0.0
    %126 = vmatprep.subr.mxu0 0.0
    %127 = vmatpush1.msra.mxu0 %v96
    %128 = vmatprep.subr.mxu0 0.0
    %129 = vmatpush1.msra.mxu0 %v81
    %130 = vmatprep.subr.mxu0 0.0
    %131 = vmatpush2.msra.mxu0 0.0
    %132 = vmatprep.subr.mxu0 0.0
    %133 = vmatpush2.msra.mxu0 0.0
    %134 = vmatprep.subr.mxu0 0.0
    %135 = vmatpush2.msra.mxu0 0.0
    %136 = vmatprep.subr.mxu0 0.0
    %137 = vmatpush2.msra.mxu0 0.0
    %138 = vmatprep.subr.mxu0 0.0
    %139 = vmatpush2.msra.mxu0 0.0
    %140 = vmatprep.subr.mxu0 0.0
    %141 = vmatpush2.msra.mxu0 0.0
    %142 = vmatprep.subr.mxu0 0.0
    %143 = vmatpush2.msra.mxu0 0.0
    %144 = vmatprep.subr.mxu0 0.0
    %145 = vmatpush2.msra.mxu0 0.0
    %146 = vmatprep.subr.mxu0 0.0
    %147 = vmatpush2.msra.mxu0 0.0
    %148 = vmatprep.subr.mxu0 0.0
    %149 = vmatpush2.msra.mxu0 0.0
    %150 = vmatprep.subr.mxu0 0.0
    %151 = vmatpush2.msra.mxu0 0.0
    %152 = vmatprep.subr.mxu0 0.0
    %153 = vmatpush2.msra.mxu0 0.0
    %154 = vmatprep.subr.mxu0 0.0
    %155 = vmatpush2.msra.mxu0 0.0
    %156 = vmatprep.subr.mxu0 0.0
    %157 = vmatpush2.msra.mxu0 0.0
    %158 = vmatprep.subr.mxu0 0.0
    %159 = vmatpush2.msra.mxu0 0.0
    %160 = vmatprep.subr.mxu0 0.0
    %161 = vmatpush2.msra.mxu0 0.0
    %162 = vmatprep.mubr.f32.mxu0 0.0
    %163 = vmatmul.mubr.f32.gmra.mxu0 %v92
    %v164 = vpop.f32.mrf.mxu0
    %v165 = vadd.f32 %v88, %v164
    %v166 = vpop.f32.mrf.mxu0
    %167 = vdwg.mxu0
    %v168 = vmax.f32 %v165, 0.0
    %v169 = vld [vmem:[#allocation7] sm:$0xff]
    %v170 = vld [vmem:[#allocation7 + $0x8] sm:$0xff]
    %v171 = vld [vmem:[#allocation7 + $0x10] sm:$0xff]
    %v172 = vld [vmem:[#allocation7 + $0x18] sm:$0xff]
    %v173 = vld [vmem:[%s4] sm:$0x1]
    %v175 = vlaneseq
    %v176 = vshrl.u32 %v175, 7
    %v177 = vsub.s32 0, %v176
    %v178 = vrot.slane %v173, %v177
    %vm180 = vcmask 261120
    %v182 = vsel %vm180, %v168, 0
    %184 = vmatprep.subr.mxu0 0.0
    %185 = vmatpush1.msra.mxu0 0.0
    %186 = vmatprep.subr.mxu0 0.0
    %187 = vmatpush1.msra.mxu0 0.0
    %188 = vmatprep.subr.mxu0 0.0
    %189 = vmatpush1.msra.mxu0 0.0
    %190 = vmatprep.subr.mxu0 0.0
    %191 = vmatpush1.msra.mxu0 0.0
    %192 = vmatprep.subr.mxu0 0.0
    %193 = vmatpush1.msra.mxu0 0.0
    %194 = vmatprep.subr.mxu0 0.0
    %195 = vmatpush1.msra.mxu0 0.0
    %196 = vmatprep.subr.mxu0 0.0
    %197 = vmatpush1.msra.mxu0 0.0
    %198 = vmatprep.subr.mxu0 0.0
    %199 = vmatpush1.msra.mxu0 0.0
    %200 = vmatprep.subr.mxu0 0.0
    %201 = vmatpush1.msra.mxu0 0.0
    %202 = vmatprep.subr.mxu0 0.0
    %203 = vmatpush1.msra.mxu0 0.0
    %204 = vmatprep.subr.mxu0 0.0
    %205 = vmatpush1.msra.mxu0 0.0
    %206 = vmatprep.subr.mxu0 0.0
    %207 = vmatpush1.msra.mxu0 0.0
    %208 = vmatprep.subr.mxu0 0.0
    %209 = vmatpush1.msra.mxu0 %v172
    %210 = vmatprep.subr.mxu0 0.0
    %211 = vmatpush1.msra.mxu0 %v171
    %212 = vmatprep.subr.mxu0 0.0
    %213 = vmatpush1.msra.mxu0 %v170
    %214 = vmatprep.subr.mxu0 0.0
    %215 = vmatpush1.msra.mxu0 %v169
    %216 = vmatprep.subr.mxu0 0.0
    %217 = vmatpush2.msra.mxu0 0.0
    %218 = vmatprep.subr.mxu0 0.0
    %219 = vmatpush2.msra.mxu0 0.0
    %220 = vmatprep.subr.mxu0 0.0
    %221 = vmatpush2.msra.mxu0 0.0
    %222 = vmatprep.subr.mxu0 0.0
    %223 = vmatpush2.msra.mxu0 0.0
    %224 = vmatprep.subr.mxu0 0.0
    %225 = vmatpush2.msra.mxu0 0.0
    %226 = vmatprep.subr.mxu0 0.0
    %227 = vmatpush2.msra.mxu0 0.0
    %228 = vmatprep.subr.mxu0 0.0
    %229 = vmatpush2.msra.mxu0 0.0
    %230 = vmatprep.subr.mxu0 0.0
    %231 = vmatpush2.msra.mxu0 0.0
    %232 = vmatprep.subr.mxu0 0.0
    %233 = vmatpush2.msra.mxu0 0.0
    %234 = vmatprep.subr.mxu0 0.0
    %235 = vmatpush2.msra.mxu0 0.0
    %236 = vmatprep.subr.mxu0 0.0
    %237 = vmatpush2.msra.mxu0 0.0
    %238 = vmatprep.subr.mxu0 0.0
    %239 = vmatpush2.msra.mxu0 0.0
    %240 = vmatprep.subr.mxu0 0.0
    %241 = vmatpush2.msra.mxu0 0.0
    %242 = vmatprep.subr.mxu0 0.0
    %243 = vmatpush2.msra.mxu0 0.0
    %244 = vmatprep.subr.mxu0 0.0
    %245 = vmatpush2.msra.mxu0 0.0
    %246 = vmatprep.subr.mxu0 0.0
    %247 = vmatpush2.msra.mxu0 0.0
    %248 = vmatprep.mubr.f32.mxu0 0.0
    %249 = vmatmul.mubr.f32.gmra.mxu0 %v182
    %v250 = vpop.f32.mrf.mxu0
    %v251 = vadd.f32 %v178, %v250
    %v252 = vpop.f32.mrf.mxu0
    %253 = vdwg.mxu0
    %v254 = vmax.f32 %v251, 0.0
    %v255 = vld [vmem:[#allocation8] sm:$0xff]
    %v256 = vld [vmem:[#allocation8 + $0x8] sm:$0xff]
    %v257 = vld [vmem:[#allocation8 + $0x10] sm:$0xff]
    %v258 = vld [vmem:[#allocation8 + $0x18] sm:$0xff]
    %v259 = vld [vmem:[%s6] sm:$0x1]
    %v261 = vlaneseq
    %v262 = vshrl.u32 %v261, 7
    %v263 = vsub.s32 0, %v262
    %v264 = vrot.slane %v259, %v263
    %v267 = vsel %vm180, %v254, 0
    %269 = vmatprep.subr.mxu0 0.0
    %270 = vmatpush1.msra.mxu0 0.0
    %271 = vmatprep.subr.mxu0 0.0
    %272 = vmatpush1.msra.mxu0 0.0
    %273 = vmatprep.subr.mxu0 0.0
    %274 = vmatpush1.msra.mxu0 0.0
    %275 = vmatprep.subr.mxu0 0.0
    %276 = vmatpush1.msra.mxu0 0.0
    %277 = vmatprep.subr.mxu0 0.0
    %278 = vmatpush1.msra.mxu0 0.0
    %279 = vmatprep.subr.mxu0 0.0
    %280 = vmatpush1.msra.mxu0 0.0
    %281 = vmatprep.subr.mxu0 0.0
    %282 = vmatpush1.msra.mxu0 0.0
    %283 = vmatprep.subr.mxu0 0.0
    %284 = vmatpush1.msra.mxu0 0.0
    %285 = vmatprep.subr.mxu0 0.0
    %286 = vmatpush1.msra.mxu0 0.0
    %287 = vmatprep.subr.mxu0 0.0
    %288 = vmatpush1.msra.mxu0 0.0
    %289 = vmatprep.subr.mxu0 0.0
    %290 = vmatpush1.msra.mxu0 0.0
    %291 = vmatprep.subr.mxu0 0.0
    %292 = vmatpush1.msra.mxu0 0.0
    %293 = vmatprep.subr.mxu0 0.0
    %294 = vmatpush1.msra.mxu0 %v258
    %295 = vmatprep.subr.mxu0 0.0
    %296 = vmatpush1.msra.mxu0 %v257
    %297 = vmatprep.subr.mxu0 0.0
    %298 = vmatpush1.msra.mxu0 %v256
    %299 = vmatprep.subr.mxu0 0.0
    %300 = vmatpush1.msra.mxu0 %v255
    %301 = vmatprep.subr.mxu0 0.0
    %302 = vmatpush2.msra.mxu0 0.0
    %303 = vmatprep.subr.mxu0 0.0
    %304 = vmatpush2.msra.mxu0 0.0
    %305 = vmatprep.subr.mxu0 0.0
    %306 = vmatpush2.msra.mxu0 0.0
    %307 = vmatprep.subr.mxu0 0.0
    %308 = vmatpush2.msra.mxu0 0.0
    %309 = vmatprep.subr.mxu0 0.0
    %310 = vmatpush2.msra.mxu0 0.0
    %311 = vmatprep.subr.mxu0 0.0
    %312 = vmatpush2.msra.mxu0 0.0
    %313 = vmatprep.subr.mxu0 0.0
    %314 = vmatpush2.msra.mxu0 0.0
    %315 = vmatprep.subr.mxu0 0.0
    %316 = vmatpush2.msra.mxu0 0.0
    %317 = vmatprep.subr.mxu0 0.0
    %318 = vmatpush2.msra.mxu0 0.0
    %319 = vmatprep.subr.mxu0 0.0
    %320 = vmatpush2.msra.mxu0 0.0
    %321 = vmatprep.subr.mxu0 0.0
    %322 = vmatpush2.msra.mxu0 0.0
    %323 = vmatprep.subr.mxu0 0.0
    %324 = vmatpush2.msra.mxu0 0.0
    %325 = vmatprep.subr.mxu0 0.0
    %326 = vmatpush2.msra.mxu0 0.0
    %327 = vmatprep.subr.mxu0 0.0
    %328 = vmatpush2.msra.mxu0 0.0
    %329 = vmatprep.subr.mxu0 0.0
    %330 = vmatpush2.msra.mxu0 0.0
    %331 = vmatprep.subr.mxu0 0.0
    %332 = vmatpush2.msra.mxu0 0.0
    %333 = vmatprep.mubr.f32.mxu0 0.0
    %334 = vmatmul.mubr.f32.gmra.mxu0 %v267
    %v335 = vpop.f32.mrf.mxu0
    %v336 = vadd.f32 %v264, %v335
    %v337 = vpop.f32.mrf.mxu0
    %338 = vdwg.mxu0
    %v339 = vmax.f32 %v336, 0.0
    %340 = vst [vmem:[#allocation10] sm:$0xff] %v339
    // Predicated region
    $region46: #{tpu_custom_call.1} parent=1 // pred_check
      _
    $region47: #{tpu_custom_call.1} parent=1 // pred_check_branch
      %342 = sbr.rel (0) target = $region49
    $region48: #{tpu_custom_call.1} parent=1 // pred_region
      %s344 = ssub.s32 128, 128
      %345 = vsyncadd [#allocation4], %s344
      %s347 = sshll.u32 [#allocation10], 4
      %s348 = int_to_ptr.vmem [resolvable:$true] %s347
      %350 = dma.vmem_to_hbm [thread:$0]  %s348, 128, %s7, [#allocation4]
    $region49: #{tpu_custom_call.1} parent=1 // pred_fallthru
      _
    // Predicated region
    $region50: #{tpu_custom_call.1} parent=1 // pred_check
      _
    $region51: #{tpu_custom_call.1} parent=1 // pred_check_branch
      %352 = sbr.rel (0) target = $region53
    $region52: #{tpu_custom_call.1} parent=1 // pred_region
      %353 = dma.done [#allocation4], 128
    $region53: #{tpu_custom_call.1} parent=1 // pred_fallthru
      _
    %354 = vsyncpa [#allocation3], 1
    %355 = vsyncpa [#allocation6], 1
    %356 = vsyncpa [#allocation9], 1
    %357 = vsyncpa [#allocation4], 1

</llo_original>
